<compile_context>
chip_gen: v7x
topology: tpu7x:2x2x1
jax: 0.10.0
libtpu: 0.0.40
codegen_flags: <defaults>
</compile_context>

<pallas_src>
import functools

import numpy as np

import jax
import jax.numpy as jnp
from jax.experimental import pallas as pl
from jax.experimental.pallas import tpu as pltpu


# ----------------------------------------------------------------------------
# Host-side parameter setup (numpy, cached per size).
# ----------------------------------------------------------------------------
@functools.lru_cache(maxsize=None)
def _bilinear_matrix_np(out_size: int, in_size: int) -> np.ndarray:
    """1-D bilinear interpolation matrix, PyTorch align_corners=False rules."""
    scale = in_size / out_size
    dst = np.arange(out_size, dtype=np.float64)
    src = (dst + 0.5) * scale - 0.5
    src = np.maximum(src, 0.0)                       # PyTorch clamps negative coords
    x0 = np.floor(src)
    x1 = np.minimum(x0 + 1.0, in_size - 1)
    w1 = src - x0
    w0 = 1.0 - w1
    m = np.zeros((out_size, in_size), dtype=np.float32)
    rows = np.arange(out_size)
    np.add.at(m, (rows, x0.astype(np.int64)), w0)
    np.add.at(m, (rows, x1.astype(np.int64)), w1)
    return m


def _round_up(x: int, m: int) -> int:
    return ((x + m - 1) // m) * m


def _compute_resized_output_size(h: int, w: int, size: int) -> tuple[int, int]:
    """torchvision semantics: resize the *smaller* edge to `size`."""
    if w <= h:
        new_w, new_h = size, int(size * h / w)
    else:
        new_h, new_w = size, int(size * w / h)
    return new_h, new_w


def _choose_block(nb: int, h_in: int, w_in: int, h_out: int, w_out_p: int,
                  itemsize: int) -> int:
    """Pick how many (H, W) planes to process per grid step."""
    per_plane = (h_in * w_in * (2 * itemsize + 2)      # double-buffered input + bf16 copy
                 + h_in * w_out_p * (4 + 2)            # f32 + bf16 intermediate
                 + h_out * w_out_p * 2 * itemsize)     # double-buffered output
    budget = 8 << 20                                   # ~8 MiB working set per block
    cap = max(1, min(nb, budget // max(per_plane, 1)))

    def ok(b: int) -> bool:
        # block evenly divides the plane count, and the (Bb*H_in, W_in) input
        # block keeps its second-to-last dim a multiple of 8 (unless full).
        return nb % b == 0 and (b == nb or (b * h_in) % 8 == 0)

    cands = [b for b in range(1, nb + 1) if ok(b) and b <= cap]
    if not cands:
        cands = [b for b in range(1, nb + 1) if ok(b)] or [nb]
    # Prefer an even grid length >= 2 so both v7x TensorCores get work, then
    # take the largest block (max amortization of per-step overhead).
    even = [b for b in cands if (nb // b) >= 2 and (nb // b) % 2 == 0]
    pool = even if even else cands
    return max(pool)


# ----------------------------------------------------------------------------
# Pallas kernel.
# ----------------------------------------------------------------------------
def _make_resize_kernel(bb: int, h_in: int, out_dtype):
    out_dtype = jnp.dtype(out_dtype)
    is_int = jnp.issubdtype(out_dtype, jnp.integer)

    def kernel(x_ref, wwt_ref, wh_ref, o_ref):
        # x_ref  : (bb*h_in, w_in)      native dtype
        # wwt_ref: (w_in,  w_out_pad)   bf16
        # wh_ref : (h_out, h_in)        bf16
        # o_ref  : (bb, h_out, w_out_pad)
        x = x_ref[...].astype(jnp.bfloat16)
        # W-resize: one large lane-dense matmul, M = bb*h_in.
        tmp = jnp.dot(x, wwt_ref[...],
                      preferred_element_type=jnp.float32)          # (bb*h_in, w_out_pad)
        wh = wh_ref[...]                                            # (h_out, h_in) bf16
        # H-resize: per-plane 2-D matmul, statically unrolled over the block.
        for b in range(bb):
            plane = tmp[b * h_in:(b + 1) * h_in, :].astype(jnp.bfloat16)
            res = jnp.dot(wh, plane, preferred_element_type=jnp.float32)
            if is_int:
                info = jnp.iinfo(out_dtype)
                res = jnp.clip(jnp.round(res), info.min, info.max)
            o_ref[b] = res.astype(o_ref.dtype)

    return kernel


@functools.lru_cache(maxsize=None)
def _build_resize(n: int, c: int, h_in: int, w_in: int,
                  h_out: int, w_out: int, dtype_name: str):
    """Build (and cache) a jitted resize function for a fixed geometry."""
    dtype = jnp.dtype(dtype_name)
    nb = n * c
    w_out_p = _round_up(w_out, 128)                    # lane-dense output width

    wh_np = _bilinear_matrix_np(h_out, h_in)           # (h_out, h_in)
    ww_np = _bilinear_matrix_np(w_out, w_in)           # (w_out, w_in)
    wwt_np = np.zeros((w_in, w_out_p), dtype=np.float32)
    wwt_np[:, :w_out] = ww_np.T
    wh_bf = jnp.asarray(wh_np, dtype=jnp.bfloat16)
    wwt_bf = jnp.asarray(wwt_np, dtype=jnp.bfloat16)

    bb = _choose_block(nb, h_in, w_in, h_out, w_out_p, dtype.itemsize)
    grid = nb // bb

    kernel = _make_resize_kernel(bb, h_in, dtype)

    call = pl.pallas_call(
        kernel,
        out_shape=jax.ShapeDtypeStruct((nb, h_out, w_out_p), dtype),
        grid_spec=pltpu.PrefetchScalarGridSpec(
            num_scalar_prefetch=0,
            grid=(grid,),
            in_specs=[
                pl.BlockSpec((bb * h_in, w_in), lambda i: (i, 0)),
                pl.BlockSpec((w_in, w_out_p), lambda i: (0, 0)),
                pl.BlockSpec((h_out, h_in), lambda i: (0, 0)),
            ],
            out_specs=pl.BlockSpec((bb, h_out, w_out_p), lambda i: (i, 0, 0)),
        ),
        compiler_params=pltpu.CompilerParams(
            dimension_semantics=("parallel",),
            vmem_limit_bytes=32 * 1024 * 1024,
        ),
    )

    def fn(x):
        x2d = x.reshape(nb * h_in, w_in)               # layout-trivial reshape
        out = call(x2d, wwt_bf, wh_bf)                 # (nb, h_out, w_out_pad)
        out = out[:, :, :w_out]                        # drop lane padding
        return out.reshape(n, c, h_out, w_out)

    return jax.jit(fn)


def pallas_resize(x: jnp.ndarray, out_h: int, out_w: int) -> jnp.ndarray:
    """Bilinear-resize an NCHW tensor to (out_h, out_w) with a Pallas kernel."""
    n, c, h_in, w_in = x.shape
    fn = _build_resize(n, c, h_in, w_in, out_h, out_w, x.dtype.name)
    return fn(x)


# ----------------------------------------------------------------------------
# Module wrapper.
# ----------------------------------------------------------------------------
class UniformResize:
    """JAX/Pallas equivalent of the PyTorch UniformResize module."""

    def __init__(self, lower: int, upper: int):
        self.lower = lower
        self.upper = upper + 1   # exclusive bound, matches torch.randint in the spec

    def __call__(self, x: jnp.ndarray, key: jax.Array) -> jnp.ndarray:
        # Host-side integer draw (equivalent of torch.randint(...).item()).
        # Not jit-compatible by design: the output shape depends on the draw.
        size = int(jax.random.randint(key, (), self.lower, self.upper))
        _, _, h, w = x.shape
        out_h, out_w = _compute_resized_output_size(h, w, size)
        if (out_h, out_w) == (h, w):
            # torchvision returns the input unchanged when no resize is needed.
            return x
        return pallas_resize(x, out_h, out_w)


if __name__ == "__main__":
    key = jax.random.PRNGKey(0)
    k_x, k_size = jax.random.split(key)

    # Small NCHW input: batch=2, channels=4, H=16, W=12 (non-square to
    # exercise the aspect-ratio-preserving smaller-edge semantics).
    x = jax.random.normal(k_x, (2, 4, 16, 12), dtype=jnp.float32)

    module = UniformResize(lower=8, upper=24)
    out = module(x, k_size)
    jax.block_until_ready(out)

    assert out.ndim == 4 and out.shape[:2] == (2, 4)
    assert bool(jnp.isfinite(out).all())
    print("KERNEL_OK")
</pallas_src>

<mosaic_0001>
module attributes {stable_mosaic.version = 11 : i64} {
  func.func @kernel(%arg0: i32, %arg1: memref<64x12xf32, #tpu.memory_space<vmem>>, %arg2: memref<12x128xbf16, #tpu.memory_space<vmem>>, %arg3: memref<22x16xbf16, #tpu.memory_space<vmem>>, %arg4: memref<4x22x128xf32, #tpu.memory_space<vmem>>) attributes {dimension_semantics = [#tpu.dimension_semantics<parallel>], iteration_bounds = array<i64: 2>, scalar_prefetch = 0 : i64, scratch_operands = 0 : i64, tpu.core_type = #tpu.core_type<tc>, window_params = [{transform_indices = @transform_0, window_bounds = array<i64: 64, 12>}, {pipeline_mode = #tpu.pipeline_mode<synchronous>, transform_indices = @transform_1, window_bounds = array<i64: 12, 128>}, {pipeline_mode = #tpu.pipeline_mode<synchronous>, transform_indices = @transform_2, window_bounds = array<i64: 22, 16>}, {transform_indices = @transform_3, window_bounds = array<i64: 4, 22, 128>}]} {
    %c0 = arith.constant 0 : index
    %c0_0 = arith.constant 0 : index
    %0 = vector.load %arg1[%c0, %c0_0] : memref<64x12xf32, #tpu.memory_space<vmem>>, vector<64x12xf32>
    %1 = arith.truncf %0 : vector<64x12xf32> to vector<64x12xbf16>
    %c0_1 = arith.constant 0 : index
    %c0_2 = arith.constant 0 : index
    %2 = vector.load %arg2[%c0_1, %c0_2] : memref<12x128xbf16, #tpu.memory_space<vmem>>, vector<12x128xbf16>
    %cst = arith.constant dense<0.000000e+00> : vector<64x128xf32>
    %3 = tpu.matmul %1, %2, %cst {dimension_numbers = #tpu.dot_dimension_numbers<[1], [0], [0], [1], [0, 0, 1, 1], [], []>} : vector<64x12xbf16>, vector<12x128xbf16>, vector<64x128xf32> -> vector<64x128xf32>
    %c0_3 = arith.constant 0 : index
    %c0_4 = arith.constant 0 : index
    %4 = vector.load %arg3[%c0_3, %c0_4] : memref<22x16xbf16, #tpu.memory_space<vmem>>, vector<22x16xbf16>
    %5 = vector.extract_strided_slice %3 {offsets = [0, 0], sizes = [16, 128], strides = [1, 1]} : vector<64x128xf32> to vector<16x128xf32>
    %6 = arith.truncf %5 : vector<16x128xf32> to vector<16x128xbf16>
    %cst_5 = arith.constant dense<0.000000e+00> : vector<22x128xf32>
    %7 = tpu.matmul %4, %6, %cst_5 {dimension_numbers = #tpu.dot_dimension_numbers<[1], [0], [0], [1], [0, 0, 1, 1], [], []>} : vector<22x16xbf16>, vector<16x128xbf16>, vector<22x128xf32> -> vector<22x128xf32>
    %c0_6 = arith.constant 0 : index
    %c0_7 = arith.constant 0 : index
    %c0_8 = arith.constant 0 : index
    %8 = vector.load %arg4[%c0_6, %c0_7, %c0_8] : memref<4x22x128xf32, #tpu.memory_space<vmem>>, vector<1x22x128xf32>
    %9 = vector.shape_cast %8 : vector<1x22x128xf32> to vector<22x128xf32>
    %10 = vector.shape_cast %7 : vector<22x128xf32> to vector<1x22x128xf32>
    tpu.vector_store %arg4[%c0_6, %c0_7, %c0_8], %10 {strides = array<i32>} : memref<4x22x128xf32, #tpu.memory_space<vmem>>, vector<1x22x128xf32>,
    %11 = vector.extract_strided_slice %3 {offsets = [16, 0], sizes = [16, 128], strides = [1, 1]} : vector<64x128xf32> to vector<16x128xf32>
    %12 = arith.truncf %11 : vector<16x128xf32> to vector<16x128xbf16>
    %cst_9 = arith.constant dense<0.000000e+00> : vector<22x128xf32>
    %13 = tpu.matmul %4, %12, %cst_9 {dimension_numbers = #tpu.dot_dimension_numbers<[1], [0], [0], [1], [0, 0, 1, 1], [], []>} : vector<22x16xbf16>, vector<16x128xbf16>, vector<22x128xf32> -> vector<22x128xf32>
    %c1 = arith.constant 1 : index
    %c0_10 = arith.constant 0 : index
    %c0_11 = arith.constant 0 : index
    %14 = vector.load %arg4[%c1, %c0_10, %c0_11] : memref<4x22x128xf32, #tpu.memory_space<vmem>>, vector<1x22x128xf32>
    %15 = vector.shape_cast %14 : vector<1x22x128xf32> to vector<22x128xf32>
    %16 = vector.shape_cast %13 : vector<22x128xf32> to vector<1x22x128xf32>
    tpu.vector_store %arg4[%c1, %c0_10, %c0_11], %16 {strides = array<i32>} : memref<4x22x128xf32, #tpu.memory_space<vmem>>, vector<1x22x128xf32>,
    %17 = vector.extract_strided_slice %3 {offsets = [32, 0], sizes = [16, 128], strides = [1, 1]} : vector<64x128xf32> to vector<16x128xf32>
    %18 = arith.truncf %17 : vector<16x128xf32> to vector<16x128xbf16>
    %cst_12 = arith.constant dense<0.000000e+00> : vector<22x128xf32>
    %19 = tpu.matmul %4, %18, %cst_12 {dimension_numbers = #tpu.dot_dimension_numbers<[1], [0], [0], [1], [0, 0, 1, 1], [], []>} : vector<22x16xbf16>, vector<16x128xbf16>, vector<22x128xf32> -> vector<22x128xf32>
    %c2 = arith.constant 2 : index
    %c0_13 = arith.constant 0 : index
    %c0_14 = arith.constant 0 : index
    %20 = vector.load %arg4[%c2, %c0_13, %c0_14] : memref<4x22x128xf32, #tpu.memory_space<vmem>>, vector<1x22x128xf32>
    %21 = vector.shape_cast %20 : vector<1x22x128xf32> to vector<22x128xf32>
    %22 = vector.shape_cast %19 : vector<22x128xf32> to vector<1x22x128xf32>
    tpu.vector_store %arg4[%c2, %c0_13, %c0_14], %22 {strides = array<i32>} : memref<4x22x128xf32, #tpu.memory_space<vmem>>, vector<1x22x128xf32>,
    %23 = vector.extract_strided_slice %3 {offsets = [48, 0], sizes = [16, 128], strides = [1, 1]} : vector<64x128xf32> to vector<16x128xf32>
    %24 = arith.truncf %23 : vector<16x128xf32> to vector<16x128xbf16>
    %cst_15 = arith.constant dense<0.000000e+00> : vector<22x128xf32>
    %25 = tpu.matmul %4, %24, %cst_15 {dimension_numbers = #tpu.dot_dimension_numbers<[1], [0], [0], [1], [0, 0, 1, 1], [], []>} : vector<22x16xbf16>, vector<16x128xbf16>, vector<22x128xf32> -> vector<22x128xf32>
    %c3 = arith.constant 3 : index
    %c0_16 = arith.constant 0 : index
    %c0_17 = arith.constant 0 : index
    %26 = vector.load %arg4[%c3, %c0_16, %c0_17] : memref<4x22x128xf32, #tpu.memory_space<vmem>>, vector<1x22x128xf32>
    %27 = vector.shape_cast %26 : vector<1x22x128xf32> to vector<22x128xf32>
    %28 = vector.shape_cast %25 : vector<22x128xf32> to vector<1x22x128xf32>
    tpu.vector_store %arg4[%c3, %c0_16, %c0_17], %28 {strides = array<i32>} : memref<4x22x128xf32, #tpu.memory_space<vmem>>, vector<1x22x128xf32>,
    return
  }
  func.func @transform_0(%arg0: i32) -> (i32, i32) {
    %c0_i32 = arith.constant 0 : i32
    %c0_i32_0 = arith.constant 0 : i32
    return %arg0, %c0_i32 : i32, i32
  }
  func.func @transform_1(%arg0: i32) -> (i32, i32) {
    %c0_i32 = arith.constant 0 : i32
    %c0_i32_0 = arith.constant 0 : i32
    %c0_i32_1 = arith.constant 0 : i32
    return %c0_i32, %c0_i32_0 : i32, i32
  }
  func.func @transform_2(%arg0: i32) -> (i32, i32) {
    %c0_i32 = arith.constant 0 : i32
    %c0_i32_0 = arith.constant 0 : i32
    %c0_i32_1 = arith.constant 0 : i32
    return %c0_i32, %c0_i32_0 : i32, i32
  }
  func.func @transform_3(%arg0: i32) -> (i32, i32, i32) {
    %c0_i32 = arith.constant 0 : i32
    %c0_i32_0 = arith.constant 0 : i32
    %c0_i32_1 = arith.constant 0 : i32
    return %arg0, %c0_i32, %c0_i32_0 : i32, i32, i32
  }
}

</mosaic_0001>

<llo_original>
// kernel: fn.1
$region0: #{fn.1}
  #allocation0 [shape = 'u32[]', space=smem, size = 0x4, offset = 0x4, fixed_abs, tag = 'smem constant byte address 0x4 - core index']
  #allocation1 [shape = 'u32[144,128]{1,0:T(1,128)}', space=vmem, size = 0x12000, scoped, tag = 'internal scratch']
  %s0 = inlined_call_operand.vmem [shape: f32[128,12], index: 0, kind: input, shape index: {}]
  %s1 = inlined_call_operand.vmem [shape: bf16[12,128], index: 1, kind: input, shape index: {}]
  %s2 = inlined_call_operand.vmem [shape: bf16[22,16], index: 2, kind: input, shape index: {}]
  %s3 = inlined_call_operand.vmem [shape: f32[8,22,128], index: 3, kind: output, shape index: {}]
  %s4 = sld [smem:[#allocation0]]
  $region45: #{fn.1} parent=0
    _
  %s6 = ssub.s32 1, %s4
  %s7 = scalar_select 0, %s6, %s4
  loop: start=0, step=1, limit=4
  $region2: #{fn.1} parent=0 // loop_pre_header
    _
  $region3: #{fn.1} parent=0 // loop_header
    %s9 = sphi 0, %s13
    %p10 = scmp.ge.s32.totalorder %s9, 4
    %s19 = sphi 0, %s21
    %s22 = sphi 0, %s19
    %s23 = sphi 0, %s22
    %s39 = sphi 0, %s23
    %s43 = sphi 0, %s43
    %s45 = sphi 0, %s43
    %s46 = sphi 0, %s45
    %s60 = sphi 0, %s46
    %s64 = sphi 0, %s64
    %s66 = sphi 0, %s64
    %s67 = sphi 0, %s66
    %s81 = sphi 0, %s67
    %s87 = sphi 0, %s89
    %s90 = sphi 0, %s87
    %s91 = sphi 0, %s90
    %s107 = sphi 0, %s91
  $region4: #{fn.1} parent=0 // loop_header_branch
    %12 = sbr.rel (%p10) target = $region8
  $region5: #{fn.1} parent=0 // loop_body
    %s14 = ssub.s32 %s9, 1
    %s15 = ssub.s32 %s9, 2
    %s16 = sadd.s32 %s9, 1
    %s17 = ssub.s32 %s9, %s16
    %p18 = scmp.eq.s32.totalorder %s17, 0
    %s20 = sadd.s32 %s19, 1
    %s21 = scalar_select %p18, %s19, %s20
    %p24 = pneg %p18
    %p25 = scmp.eq.s32.totalorder %s9, 1
    %p26 = por %p24, %p25
    %p27 = scmp.ne.s32.totalorder %s19, %s22
    %p28 = scmp.eq.s32.totalorder %s9, 0
    %p29 = por %p27, %p28
    %p30 = scmp.ne.s32.totalorder %s19, %s22
    %p31 = scmp.eq.s32.totalorder %s14, 1
    %p32 = por %p30, %p31
    %p33 = scmp.ne.s32.totalorder %s22, %s23
    %p34 = scmp.eq.s32.totalorder %s14, 0
    %p35 = por %p33, %p34
    %p36 = scmp.ne.s32.totalorder %s22, %s23
    %p37 = scmp.eq.s32.totalorder %s15, 1
    %p38 = por %p36, %p37
    %p40 = scmp.ne.s32.totalorder %s23, %s39
    %p41 = scmp.eq.s32.totalorder %s15, 0
    %p42 = por %p40, %p41
    %s44 = sadd.s32 %s43, 1
    %p47 = scmp.eq.s32.totalorder %s9, 1
    %p48 = scmp.ne.s32.totalorder %s43, %s45
    %p49 = scmp.eq.s32.totalorder %s9, 0
    %p50 = por %p48, %p49
    %p51 = scmp.ne.s32.totalorder %s43, %s45
    %p52 = scmp.eq.s32.totalorder %s14, 1
    %p53 = por %p51, %p52
    %p54 = scmp.ne.s32.totalorder %s45, %s46
    %p55 = scmp.eq.s32.totalorder %s14, 0
    %p56 = por %p54, %p55
    %p57 = scmp.ne.s32.totalorder %s45, %s46
    %p58 = scmp.eq.s32.totalorder %s15, 1
    %p59 = por %p57, %p58
    %p61 = scmp.ne.s32.totalorder %s46, %s60
    %p62 = scmp.eq.s32.totalorder %s15, 0
    %p63 = por %p61, %p62
    %s65 = sadd.s32 %s64, 1
    %p68 = scmp.eq.s32.totalorder %s9, 1
    %p69 = scmp.ne.s32.totalorder %s64, %s66
    %p70 = scmp.eq.s32.totalorder %s9, 0
    %p71 = por %p69, %p70
    %p72 = scmp.ne.s32.totalorder %s64, %s66
    %p73 = scmp.eq.s32.totalorder %s14, 1
    %p74 = por %p72, %p73
    %p75 = scmp.ne.s32.totalorder %s66, %s67
    %p76 = scmp.eq.s32.totalorder %s14, 0
    %p77 = por %p75, %p76
    %p78 = scmp.ne.s32.totalorder %s66, %s67
    %p79 = scmp.eq.s32.totalorder %s15, 1
    %p80 = por %p78, %p79
    %p82 = scmp.ne.s32.totalorder %s67, %s81
    %p83 = scmp.eq.s32.totalorder %s15, 0
    %p84 = por %p82, %p83
    %s85 = ssub.s32 %s9, %s16
    %p86 = scmp.eq.s32.totalorder %s85, 0
    %s88 = sadd.s32 %s87, 1
    %s89 = scalar_select %p86, %s87, %s88
    %p92 = pneg %p86
    %p93 = scmp.eq.s32.totalorder %s9, 1
    %p94 = por %p92, %p93
    %p95 = scmp.ne.s32.totalorder %s87, %s90
    %p96 = scmp.eq.s32.totalorder %s9, 0
    %p97 = por %p95, %p96
    %p98 = scmp.ne.s32.totalorder %s87, %s90
    %p99 = scmp.eq.s32.totalorder %s14, 1
    %p100 = por %p98, %p99
    %p101 = scmp.ne.s32.totalorder %s90, %s91
    %p102 = scmp.eq.s32.totalorder %s14, 0
    %p103 = por %p101, %p102
    %p104 = scmp.ne.s32.totalorder %s90, %s91
    %p105 = scmp.eq.s32.totalorder %s15, 1
    %p106 = por %p104, %p105
    %p108 = scmp.ne.s32.totalorder %s91, %s107
    %p109 = scmp.eq.s32.totalorder %s15, 0
    %p110 = por %p108, %p109
    %p111 = scmp.le.s32.totalorder 1, %s9
    %p112 = scmp.lt.s32.totalorder %s9, 3
    %p113 = pnand %p111, %p112
    %p114 = pneg %p113
    // Predicated region
    $region9: #{fn.1} parent=5 // pred_check
      _
    $region10: #{fn.1} parent=5 // pred_check_branch
      %116 = sbr.rel (%p113) target = $region12
    $region11: #{fn.1} parent=5 // pred_region
      %s117 = ssub.s32 %s9, 1
      // Predicated region
      $region13: #{fn.1} parent=11 // pred_check
        %p118 = pneg %p56
      $region14: #{fn.1} parent=11 // pred_check_branch
        %120 = sbr.rel (%p118) target = $region16
      $region15: #{fn.1} parent=11 // pred_region
        _
      $region16: #{fn.1} parent=11 // pred_fallthru
        _
      // Predicated region
      $region17: #{fn.1} parent=11 // pred_check
        %p121 = pneg %p77
      $region18: #{fn.1} parent=11 // pred_check_branch
        %123 = sbr.rel (%p121) target = $region20
      $region19: #{fn.1} parent=11 // pred_region
        _
      $region20: #{fn.1} parent=11 // pred_fallthru
        _
    $region12: #{fn.1} parent=5 // pred_fallthru
      _
    %p124 = scmp.lt.s32.totalorder %s9, 2
    // Predicated region
    $region21: #{fn.1} parent=5 // pred_check
      %p125 = pneg %p124
    $region22: #{fn.1} parent=5 // pred_check_branch
      %127 = sbr.rel (%p125) target = $region24
    $region23: #{fn.1} parent=5 // pred_region
      // Predicated region
      $region25: #{fn.1} parent=23 // pred_check
        %p128 = pneg %p29
      $region26: #{fn.1} parent=23 // pred_check_branch
        %130 = sbr.rel (%p128) target = $region28
      $region27: #{fn.1} parent=23 // pred_region
        %s131 = smul.u32 8, %s9
        %p132 = scmp.lt.s32.totalorder %s131, 15
        %s133 = scalar_select %p132, %s131, 15
        %s134 = smul.addr %s133, 8
        %s135 = scalar_lea.vmem %s0, %s134
        %s136 = smul.u32 8, %s9
      $region28: #{fn.1} parent=23 // pred_fallthru
        _
    $region24: #{fn.1} parent=5 // pred_fallthru
      _
    %p137 = scmp.le.s32.totalorder 1, %s9
    %p138 = scmp.lt.s32.totalorder %s9, 3
    %p139 = pnand %p137, %p138
    %p140 = pneg %p139
    // Predicated region
    $region29: #{fn.1} parent=5 // pred_check
      _
    $region30: #{fn.1} parent=5 // pred_check_branch
      %142 = sbr.rel (%p139) target = $region32
    $region31: #{fn.1} parent=5 // pred_region
      %s143 = ssub.s32 %s9, 1
      %s144 = smul.u32 8, %s14
      %p145 = scmp.lt.s32.totalorder %s144, 15
      %s146 = scalar_select %p145, %s144, 15
      %s147 = smul.addr %s146, 8
      %s148 = scalar_lea.vmem %s0, %s147
      %p149 = pneg %p35
      %p150 = pneg %p32
      %p151 = pneg %p56
      %p152 = pneg %p53
      %p153 = pneg %p77
      %p154 = pneg %p74
      %p155 = pneg %p103
      %p156 = pneg %p100
      %s157 = smul.u32 4, %s14
      %p158 = scmp.lt.s32.totalorder %s157, 7
      %s159 = scalar_select %p158, %s157, 7
      %s160 = smul.addr %s159, 3
      %s161 = smul.addr %s160, 8
      %s162 = scalar_lea.vmem %s3, %s161
      %s163 = smul.u32 8, %s14
      %p164 = scmp.lt.s32.totalorder %s163, 15
      %s165 = scalar_select %p164, %s163, 15
      %s166 = smul.addr %s165, 8
      %s167 = scalar_lea.vmem %s0, %s166
      %s168 = smul.u32 8, %s14
      %s169 = smul.u32 4, %s14
      %p170 = scmp.lt.s32.totalorder %s169, 7
      %s171 = scalar_select %p170, %s169, 7
      %s172 = smul.addr %s171, 3
      %s173 = smul.addr %s172, 8
      %s174 = scalar_lea.vmem %s3, %s173
      %s175 = smul.u32 4, %s14
      %v177 = vld [vmem:[%s167] sm:$0xff]
      %v178 = vld [vmem:[%s167 + $0x8] sm:$0xff]
      %v179 = vld [vmem:[%s167 + $0x10] sm:$0xff]
      %v180 = vld [vmem:[%s167 + $0x18] sm:$0xff]
      %v181 = vld [vmem:[%s167 + $0x20] sm:$0xff]
      %v182 = vld [vmem:[%s167 + $0x28] sm:$0xff]
      %v183 = vld [vmem:[%s167 + $0x30] sm:$0xff]
      %v184 = vld [vmem:[%s167 + $0x38] sm:$0xff]
      %v185 = vpack.c.bf16 %v178, %v177
      %v186 = vpack.c.bf16 %v180, %v179
      %v187 = vpack.c.bf16 %v182, %v181
      %v188 = vpack.c.bf16 %v184, %v183
      %v189 = vld [vmem:[%s1] sm:$0xf]
      %v190 = vld [vmem:[%s1 + $0x4] sm:$0x3]
      %v193 = vunpack.c.l.b16 %v189
      %v194 = vunpack.c.l.b16 %v190
      %v195 = vpack.c.b16 %v194, %v193
      %vm196 = vcmask 97280
      %v198 = vsel %vm196, %v185, 0
      %v201 = vsel %vm196, %v186, 0
      %v204 = vsel %vm196, %v187, 0
      %v207 = vsel %vm196, %v188, 0
      %vm209 = vcmask 1045504
      %v211 = vsel %vm209, %v195, 0
      %213 = vmatprep.subr.bf16.mxu0 0
      %214 = vmatpush1.bf16.msra.mxu0 %v211
      %215 = vmatprep.subr.bf16.mxu0 0
      %216 = vmatpush1.bf16.msra.mxu0 0
      %217 = vmatprep.subr.bf16.mxu0 0
      %218 = vmatpush1.bf16.msra.mxu0 0
      %219 = vmatprep.subr.bf16.mxu0 0
      %220 = vmatpush1.bf16.msra.mxu0 0
      %221 = vmatprep.subr.bf16.mxu0 0
      %222 = vmatpush1.bf16.msra.mxu0 0
      %223 = vmatprep.subr.bf16.mxu0 0
      %224 = vmatpush1.bf16.msra.mxu0 0
      %225 = vmatprep.subr.bf16.mxu0 0
      %226 = vmatpush1.bf16.msra.mxu0 0
      %227 = vmatprep.subr.bf16.mxu0 0
      %228 = vmatpush1.bf16.msra.mxu0 0
      %229 = vmatprep.subr.bf16.mxu0 0
      %230 = vmatpush1.bf16.msra.mxu0 0
      %231 = vmatprep.subr.bf16.mxu0 0
      %232 = vmatpush1.bf16.msra.mxu0 0
      %233 = vmatprep.subr.bf16.mxu0 0
      %234 = vmatpush1.bf16.msra.mxu0 0
      %235 = vmatprep.subr.bf16.mxu0 0
      %236 = vmatpush1.bf16.msra.mxu0 0
      %237 = vmatprep.subr.bf16.mxu0 0
      %238 = vmatpush1.bf16.msra.mxu0 0
      %239 = vmatprep.subr.bf16.mxu0 0
      %240 = vmatpush1.bf16.msra.mxu0 0
      %241 = vmatprep.subr.bf16.mxu0 0
      %242 = vmatpush1.bf16.msra.mxu0 0
      %243 = vmatprep.subr.bf16.mxu0 0
      %244 = vmatpush1.bf16.msra.mxu0 0
      %245 = vmatprep.mubr.bf16.mxu0 0
      %246 = vmatmul.mubr.bf16.gmra.mrb[0].mxu0 %v198
      %v247 = vpop.f32.mrb[0].mxu0
      %v248 = vadd.f32 0.0, %v247
      %v249 = vpop.f32.mrb[0].mxu0
      %v250 = vpop.f32.mrb[0].mxu0
      %v251 = vadd.f32 0.0, %v250
      %v252 = vpop.f32.mrb[0].mxu0
      %253 = vmatprep.mubr.bf16.mxu0 0
      %254 = vmatmul.mubr.bf16.gmra.mrb[0].mxu0 %v201
      %v255 = vpop.f32.mrb[0].mxu0
      %v256 = vadd.f32 0.0, %v255
      %v257 = vpop.f32.mrb[0].mxu0
      %v258 = vpop.f32.mrb[0].mxu0
      %v259 = vadd.f32 0.0, %v258
      %v260 = vpop.f32.mrb[0].mxu0
      %261 = vmatprep.mubr.bf16.mxu0 0
      %262 = vmatmul.mubr.bf16.gmra.mrb[0].mxu0 %v204
      %v263 = vpop.f32.mrb[0].mxu0
      %v264 = vadd.f32 0.0, %v263
      %v265 = vpop.f32.mrb[0].mxu0
      %v266 = vpop.f32.mrb[0].mxu0
      %v267 = vadd.f32 0.0, %v266
      %v268 = vpop.f32.mrb[0].mxu0
      %269 = vmatprep.mubr.bf16.mxu0 0
      %270 = vmatmul.mubr.bf16.gmra.mrb[0].mxu0 %v207
      %v271 = vpop.f32.mrb[0].mxu0
      %v272 = vadd.f32 0.0, %v271
      %v273 = vpop.f32.mrb[0].mxu0
      %v274 = vpop.f32.mrb[0].mxu0
      %v275 = vadd.f32 0.0, %v274
      %v276 = vpop.f32.mrb[0].mxu0
      %277 = vdwg.mxu0
      %v278 = vld [vmem:[%s2] sm:$0xf]
      %v279 = vld [vmem:[%s2 + $0x4] sm:$0xf]
      %v280 = vld [vmem:[%s2 + $0x8] sm:$0x7]
      %v281 = vpack.c.bf16 %v251, %v248
      %v285 = vunpack.c.l.b16 %v278
      %v286 = vunpack.c.l.b16 %v279
      %v287 = vunpack.c.l.b16 %v280
      %v288 = vpack.c.b16 %v286, %v285
      %v289 = vpack.c.b16 %v287, %v287
      %vm290 = vcmask 130048
      %v292 = vsel %vm290, %v288, 0
      %v295 = vsel %vm290, %v289, 0
      %297 = vmatprep.subr.bf16.mxu0 0
      %298 = vmatpush1.bf16.msra.mxu0 %v281
      %299 = vmatprep.subr.bf16.mxu0 0
      %300 = vmatpush1.bf16.msra.mxu0 0
      %301 = vmatprep.subr.bf16.mxu0 0
      %302 = vmatpush1.bf16.msra.mxu0 0
      %303 = vmatprep.subr.bf16.mxu0 0
      %304 = vmatpush1.bf16.msra.mxu0 0
      %305 = vmatprep.subr.bf16.mxu0 0
      %306 = vmatpush1.bf16.msra.mxu0 0
      %307 = vmatprep.subr.bf16.mxu0 0
      %308 = vmatpush1.bf16.msra.mxu0 0
      %309 = vmatprep.subr.bf16.mxu0 0
      %310 = vmatpush1.bf16.msra.mxu0 0
      %311 = vmatprep.subr.bf16.mxu0 0
      %312 = vmatpush1.bf16.msra.mxu0 0
      %313 = vmatprep.subr.bf16.mxu0 0
      %314 = vmatpush1.bf16.msra.mxu0 0
      %315 = vmatprep.subr.bf16.mxu0 0
      %316 = vmatpush1.bf16.msra.mxu0 0
      %317 = vmatprep.subr.bf16.mxu0 0
      %318 = vmatpush1.bf16.msra.mxu0 0
      %319 = vmatprep.subr.bf16.mxu0 0
      %320 = vmatpush1.bf16.msra.mxu0 0
      %321 = vmatprep.subr.bf16.mxu0 0
      %322 = vmatpush1.bf16.msra.mxu0 0
      %323 = vmatprep.subr.bf16.mxu0 0
      %324 = vmatpush1.bf16.msra.mxu0 0
      %325 = vmatprep.subr.bf16.mxu0 0
      %326 = vmatpush1.bf16.msra.mxu0 0
      %327 = vmatprep.subr.bf16.mxu0 0
      %328 = vmatpush1.bf16.msra.mxu0 0
      %329 = vmatprep.mubr.bf16.mxu0 0
      %330 = vmatmul.mubr.bf16.gmra.mrb[0].mxu0 %v292
      %v331 = vpop.f32.mrb[0].mxu0
      %v332 = vadd.f32 0.0, %v331
      %v333 = vpop.f32.mrb[0].mxu0
      %v334 = vpop.f32.mrb[0].mxu0
      %v335 = vadd.f32 0.0, %v334
      %v336 = vpop.f32.mrb[0].mxu0
      %337 = vmatprep.mubr.bf16.mxu0 0
      %338 = vmatmul.mubr.bf16.gmra.mrb[0].mxu0 %v295
      %v339 = vpop.f32.mrb[0].mxu0
      %v340 = vadd.f32 0.0, %v339
      %v341 = vpop.f32.mrb[0].mxu0
      %v342 = vpop.f32.mrb[0].mxu0
      %v343 = vpop.f32.mrb[0].mxu0
      %344 = vdwg.mxu0
      %345 = vst [vmem:[%s174] sm:$0xff] %v332
      %346 = vst [vmem:[%s174 + $0x8] sm:$0xff] %v335
      %347 = vst [vmem:[%s174 + $0x10] sm:$0x3f] %v340
      %v348 = vpack.c.bf16 %v259, %v256
      %349 = vmatprep.subr.bf16.mxu0 0
      %350 = vmatpush1.bf16.msra.mxu0 %v348
      %351 = vmatprep.subr.bf16.mxu0 0
      %352 = vmatpush1.bf16.msra.mxu0 0
      %353 = vmatprep.subr.bf16.mxu0 0
      %354 = vmatpush1.bf16.msra.mxu0 0
      %355 = vmatprep.subr.bf16.mxu0 0
      %356 = vmatpush1.bf16.msra.mxu0 0
      %357 = vmatprep.subr.bf16.mxu0 0
      %358 = vmatpush1.bf16.msra.mxu0 0
      %359 = vmatprep.subr.bf16.mxu0 0
      %360 = vmatpush1.bf16.msra.mxu0 0
      %361 = vmatprep.subr.bf16.mxu0 0
      %362 = vmatpush1.bf16.msra.mxu0 0
      %363 = vmatprep.subr.bf16.mxu0 0
      %364 = vmatpush1.bf16.msra.mxu0 0
      %365 = vmatprep.subr.bf16.mxu0 0
      %366 = vmatpush1.bf16.msra.mxu0 0
      %367 = vmatprep.subr.bf16.mxu0 0
      %368 = vmatpush1.bf16.msra.mxu0 0
      %369 = vmatprep.subr.bf16.mxu0 0
      %370 = vmatpush1.bf16.msra.mxu0 0
      %371 = vmatprep.subr.bf16.mxu0 0
      %372 = vmatpush1.bf16.msra.mxu0 0
      %373 = vmatprep.subr.bf16.mxu0 0
      %374 = vmatpush1.bf16.msra.mxu0 0
      %375 = vmatprep.subr.bf16.mxu0 0
      %376 = vmatpush1.bf16.msra.mxu0 0
      %377 = vmatprep.subr.bf16.mxu0 0
      %378 = vmatpush1.bf16.msra.mxu0 0
      %379 = vmatprep.subr.bf16.mxu0 0
      %380 = vmatpush1.bf16.msra.mxu0 0
      %381 = vmatprep.mubr.bf16.mxu0 0
      %382 = vmatmul.mubr.bf16.gmra.mrb[0].mxu0 %v292
      %v383 = vpop.f32.mrb[0].mxu0
      %v384 = vadd.f32 0.0, %v383
      %v385 = vpop.f32.mrb[0].mxu0
      %v386 = vpop.f32.mrb[0].mxu0
      %v387 = vadd.f32 0.0, %v386
      %v388 = vpop.f32.mrb[0].mxu0
      %389 = vmatprep.mubr.bf16.mxu0 0
      %390 = vmatmul.mubr.bf16.gmra.mrb[0].mxu0 %v295
      %v391 = vpop.f32.mrb[0].mxu0
      %v392 = vadd.f32 0.0, %v391
      %v393 = vpop.f32.mrb[0].mxu0
      %v394 = vpop.f32.mrb[0].mxu0
      %v395 = vpop.f32.mrb[0].mxu0
      %396 = vdwg.mxu0
      %s397 = scalar_lea.vmem %s174, 24
      %398 = vst [vmem:[%s397] sm:$0xff] %v384
      %399 = vst [vmem:[%s397 + $0x8] sm:$0xff] %v387
      %400 = vst [vmem:[%s397 + $0x10] sm:$0x3f] %v392
      %v401 = vpack.c.bf16 %v267, %v264
      %402 = vmatprep.subr.bf16.mxu0 0
      %403 = vmatpush1.bf16.msra.mxu0 %v401
      %404 = vmatprep.subr.bf16.mxu0 0
      %405 = vmatpush1.bf16.msra.mxu0 0
      %406 = vmatprep.subr.bf16.mxu0 0
      %407 = vmatpush1.bf16.msra.mxu0 0
      %408 = vmatprep.subr.bf16.mxu0 0
      %409 = vmatpush1.bf16.msra.mxu0 0
      %410 = vmatprep.subr.bf16.mxu0 0
      %411 = vmatpush1.bf16.msra.mxu0 0
      %412 = vmatprep.subr.bf16.mxu0 0
      %413 = vmatpush1.bf16.msra.mxu0 0
      %414 = vmatprep.subr.bf16.mxu0 0
      %415 = vmatpush1.bf16.msra.mxu0 0
      %416 = vmatprep.subr.bf16.mxu0 0
      %417 = vmatpush1.bf16.msra.mxu0 0
      %418 = vmatprep.subr.bf16.mxu0 0
      %419 = vmatpush1.bf16.msra.mxu0 0
      %420 = vmatprep.subr.bf16.mxu0 0
      %421 = vmatpush1.bf16.msra.mxu0 0
      %422 = vmatprep.subr.bf16.mxu0 0
      %423 = vmatpush1.bf16.msra.mxu0 0
      %424 = vmatprep.subr.bf16.mxu0 0
      %425 = vmatpush1.bf16.msra.mxu0 0
      %426 = vmatprep.subr.bf16.mxu0 0
      %427 = vmatpush1.bf16.msra.mxu0 0
      %428 = vmatprep.subr.bf16.mxu0 0
      %429 = vmatpush1.bf16.msra.mxu0 0
      %430 = vmatprep.subr.bf16.mxu0 0
      %431 = vmatpush1.bf16.msra.mxu0 0
      %432 = vmatprep.subr.bf16.mxu0 0
      %433 = vmatpush1.bf16.msra.mxu0 0
      %434 = vmatprep.mubr.bf16.mxu0 0
      %435 = vmatmul.mubr.bf16.gmra.mrb[0].mxu0 %v292
      %v436 = vpop.f32.mrb[0].mxu0
      %v437 = vadd.f32 0.0, %v436
      %v438 = vpop.f32.mrb[0].mxu0
      %v439 = vpop.f32.mrb[0].mxu0
      %v440 = vadd.f32 0.0, %v439
      %v441 = vpop.f32.mrb[0].mxu0
      %442 = vmatprep.mubr.bf16.mxu0 0
      %443 = vmatmul.mubr.bf16.gmra.mrb[0].mxu0 %v295
      %v444 = vpop.f32.mrb[0].mxu0
      %v445 = vadd.f32 0.0, %v444
      %v446 = vpop.f32.mrb[0].mxu0
      %v447 = vpop.f32.mrb[0].mxu0
      %v448 = vpop.f32.mrb[0].mxu0
      %449 = vdwg.mxu0
      %s450 = scalar_lea.vmem %s174, 48
      %451 = vst [vmem:[%s450] sm:$0xff] %v437
      %452 = vst [vmem:[%s450 + $0x8] sm:$0xff] %v440
      %453 = vst [vmem:[%s450 + $0x10] sm:$0x3f] %v445
      %v454 = vpack.c.bf16 %v275, %v272
      %455 = vmatprep.subr.bf16.mxu0 0
      %456 = vmatpush1.bf16.msra.mxu0 %v454
      %457 = vmatprep.subr.bf16.mxu0 0
      %458 = vmatpush1.bf16.msra.mxu0 0
      %459 = vmatprep.subr.bf16.mxu0 0
      %460 = vmatpush1.bf16.msra.mxu0 0
      %461 = vmatprep.subr.bf16.mxu0 0
      %462 = vmatpush1.bf16.msra.mxu0 0
      %463 = vmatprep.subr.bf16.mxu0 0
      %464 = vmatpush1.bf16.msra.mxu0 0
      %465 = vmatprep.subr.bf16.mxu0 0
      %466 = vmatpush1.bf16.msra.mxu0 0
      %467 = vmatprep.subr.bf16.mxu0 0
      %468 = vmatpush1.bf16.msra.mxu0 0
      %469 = vmatprep.subr.bf16.mxu0 0
      %470 = vmatpush1.bf16.msra.mxu0 0
      %471 = vmatprep.subr.bf16.mxu0 0
      %472 = vmatpush1.bf16.msra.mxu0 0
      %473 = vmatprep.subr.bf16.mxu0 0
      %474 = vmatpush1.bf16.msra.mxu0 0
      %475 = vmatprep.subr.bf16.mxu0 0
      %476 = vmatpush1.bf16.msra.mxu0 0
      %477 = vmatprep.subr.bf16.mxu0 0
      %478 = vmatpush1.bf16.msra.mxu0 0
      %479 = vmatprep.subr.bf16.mxu0 0
      %480 = vmatpush1.bf16.msra.mxu0 0
      %481 = vmatprep.subr.bf16.mxu0 0
      %482 = vmatpush1.bf16.msra.mxu0 0
      %483 = vmatprep.subr.bf16.mxu0 0
      %484 = vmatpush1.bf16.msra.mxu0 0
      %485 = vmatprep.subr.bf16.mxu0 0
      %486 = vmatpush1.bf16.msra.mxu0 0
      %487 = vmatprep.mubr.bf16.mxu0 0
      %488 = vmatmul.mubr.bf16.gmra.mrb[0].mxu0 %v292
      %v489 = vpop.f32.mrb[0].mxu0
      %v490 = vadd.f32 0.0, %v489
      %v491 = vpop.f32.mrb[0].mxu0
      %v492 = vpop.f32.mrb[0].mxu0
      %v493 = vadd.f32 0.0, %v492
      %v494 = vpop.f32.mrb[0].mxu0
      %495 = vmatprep.mubr.bf16.mxu0 0
      %496 = vmatmul.mubr.bf16.gmra.mrb[0].mxu0 %v295
      %v497 = vpop.f32.mrb[0].mxu0
      %v498 = vadd.f32 0.0, %v497
      %v499 = vpop.f32.mrb[0].mxu0
      %v500 = vpop.f32.mrb[0].mxu0
      %v501 = vpop.f32.mrb[0].mxu0
      %502 = vdwg.mxu0
      %s503 = scalar_lea.vmem %s174, 72
      %504 = vst [vmem:[%s503] sm:$0xff] %v490
      %505 = vst [vmem:[%s503 + $0x8] sm:$0xff] %v493
      %506 = vst [vmem:[%s503 + $0x10] sm:$0x3f] %v498
      %s507 = smul.u32 4, %s14
      %p508 = scmp.lt.s32.totalorder %s507, 7
      %s509 = scalar_select %p508, %s507, 7
      %s510 = smul.addr %s509, 3
      %s511 = smul.addr %s510, 8
      %s512 = scalar_lea.vmem %s3, %s511
      // Predicated region
      $region33: #{fn.1} parent=31 // pred_check
        %p513 = pneg %p100
      $region34: #{fn.1} parent=31 // pred_check_branch
        %515 = sbr.rel (%p513) target = $region36
      $region35: #{fn.1} parent=31 // pred_region
        %s516 = smul.u32 4, %s14
      $region36: #{fn.1} parent=31 // pred_fallthru
        _
    $region32: #{fn.1} parent=5 // pred_fallthru
      _
    %p517 = scmp.le.s32.totalorder 2, %s9
    // Predicated region
    $region37: #{fn.1} parent=5 // pred_check
      %p518 = pneg %p517
    $region38: #{fn.1} parent=5 // pred_check_branch
      %520 = sbr.rel (%p518) target = $region40
    $region39: #{fn.1} parent=5 // pred_region
      %s521 = ssub.s32 %s9, 2
      // Predicated region
      $region41: #{fn.1} parent=39 // pred_check
        %p522 = pneg %p106
      $region42: #{fn.1} parent=39 // pred_check_branch
        %524 = sbr.rel (%p522) target = $region44
      $region43: #{fn.1} parent=39 // pred_region
        %s525 = smul.u32 4, %s15
        %p526 = scmp.lt.s32.totalorder %s525, 7
        %s527 = scalar_select %p526, %s525, 7
        %s528 = smul.addr %s527, 3
        %s529 = smul.addr %s528, 8
        %s530 = scalar_lea.vmem %s3, %s529
      $region44: #{fn.1} parent=39 // pred_fallthru
        _
    $region40: #{fn.1} parent=5 // pred_fallthru
      _
  $region6: #{fn.1} parent=0 // loop_footer
    %s13 = sadd.s32 1, %s9
  $region7: #{fn.1} parent=0 // loop_footer_branch
    %8 = sbr.rel target = $region3
  $region8: #{fn.1} parent=0 // loop_exit
    _

</llo_original>
